<compile_context>
chip_gen: v7x
topology: tpu7x:2x2x1
jax: 0.10.0
libtpu: 0.0.40
codegen_flags: <defaults>
</compile_context>

<pallas_src>
import jax
import jax.numpy as jnp
from jax.experimental import pallas as pl
from jax.experimental.pallas import tpu as pltpu

D_IN, D_INNER, D_OUT = 24, 100, 1
N_LAYERS = 10
PAD = 128                 # padded feature dim (lanes)
BIAS_LANE = D_INNER       # lane 100 carries the constant 1 for bias folding
N_HID_MM = N_LAYERS // 2  # pairwise-folded hidden matmuls
BATCH = 8                 # multiple of 8 sublanes


def mlp_kernel(x_ref, w_in_ref, b_in_ref, w_h_ref, w_out_ref, o_ref):
    # Input layer: one matmul + one bias add. b_in has a 1.0 in BIAS_LANE, which
    # establishes the constant-1 lane used to fold every subsequent bias.
    h = jnp.dot(x_ref[...], w_in_ref[...],
                preferred_element_type=jnp.float32) + b_in_ref[...]
    # Hidden chain: each iteration is ONE matmul (bias lives in row BIAS_LANE of W,
    # W[BIAS_LANE, BIAS_LANE] = 1 keeps the constant lane alive).
    for j in range(N_HID_MM):
        h = jnp.dot(h, w_h_ref[j], preferred_element_type=jnp.float32)
    # Output layer: bias folded the same way; store exactly (B, D_OUT).
    o_ref[...] = jnp.dot(h, w_out_ref[...], preferred_element_type=jnp.float32)


def prepare_params(params):
    """One-time (out of the hot path) combine + fold + pad of all parameters."""
    w_in, b_in, w_ls, b_ls, w_out, b_out = params

    # forward: x = layers[i//2](x) + layers[i](x) == x @ (W[i//2]+W[i]) + (b[i//2]+b[i])
    half = jnp.arange(N_LAYERS) // 2                     # [0,0,1,1,...,4,4]
    w_c = w_ls[half] + w_ls                              # (10, 100, 100)
    b_c = b_ls[half] + b_ls                              # (10, 100)

    # Augmented affine maps: [h, 1, 0...] @ A = [h @ W + b, 1, 0...]
    A = jnp.zeros((N_LAYERS, PAD, PAD), jnp.float32)
    A = A.at[:, :D_INNER, :D_INNER].set(w_c)
    A = A.at[:, BIAS_LANE, :D_INNER].set(b_c)
    A = A.at[:, BIAS_LANE, BIAS_LANE].set(1.0)

    # Pairwise fold: compose adjacent layers -> 5 serially-dependent matmuls.
    w_h = jnp.einsum('jab,jbc->jac', A[0::2], A[1::2])   # (5, 128, 128)

    # Input layer: (24, 128) weights (no x padding needed) + bias row with constant lane.
    w_in_p = jnp.zeros((D_IN, PAD), jnp.float32).at[:, :D_INNER].set(w_in)
    b_in_p = (jnp.zeros((1, PAD), jnp.float32)
              .at[0, :D_INNER].set(b_in)
              .at[0, BIAS_LANE].set(1.0))

    # Output layer: (128, 1) with the bias folded into row BIAS_LANE.
    w_out_p = (jnp.zeros((PAD, D_OUT), jnp.float32)
               .at[:D_INNER, :].set(w_out)
               .at[BIAS_LANE, :].set(b_out))

    return (w_in_p, b_in_p, w_h, w_out_p)


@jax.jit
def deep_regression_pallas(x, prepared):
    """x: (B, 24) float32, prepared = prepare_params(params). Returns (B, 1) float32."""
    w_in_p, b_in_p, w_h, w_out_p = prepared
    B = x.shape[0]

    vmem = pl.BlockSpec(memory_space=pltpu.MemorySpace.VMEM)
    return pl.pallas_call(
        mlp_kernel,
        out_shape=jax.ShapeDtypeStruct((B, D_OUT), jnp.float32),
        in_specs=[vmem] * 5,
        out_specs=vmem,
    )(x, w_in_p, b_in_p, w_h, w_out_p)


def init_params(key):
    """Deterministic init mimicking nn.Linear defaults (U(-1/sqrt(fan_in), +))."""
    ks = jax.random.split(key, 2 * (N_LAYERS + 2))

    def linear(kw, kb, fan_in, fan_out):
        bound = 1.0 / jnp.sqrt(fan_in)
        # stored transposed: (in, out)
        w = jax.random.uniform(kw, (fan_in, fan_out), jnp.float32, -bound, bound)
        b = jax.random.uniform(kb, (fan_out,), jnp.float32, -bound, bound)
        return w, b

    w_in, b_in = linear(ks[0], ks[1], D_IN, D_INNER)
    w_ls, b_ls = [], []
    for i in range(N_LAYERS):
        w, b = linear(ks[2 + 2 * i], ks[3 + 2 * i], D_INNER, D_INNER)
        w_ls.append(w)
        b_ls.append(b)
    w_out, b_out = linear(ks[-2], ks[-1], D_INNER, D_OUT)
    return (w_in, b_in, jnp.stack(w_ls), jnp.stack(b_ls), w_out, b_out)


def ref_forward(x, params):
    """Pure-JAX reference identical to the PyTorch forward (uncombined weights)."""
    w_in, b_in, w_ls, b_ls, w_out, b_out = params
    h = x @ w_in + b_in
    for i in range(N_LAYERS):
        h = (h @ w_ls[i // 2] + b_ls[i // 2]) + (h @ w_ls[i] + b_ls[i])
    return h @ w_out + b_out


if __name__ == "__main__":
    key = jax.random.PRNGKey(0)
    kx, kp = jax.random.split(key)
    x = jax.random.normal(kx, (BATCH, D_IN), jnp.float32)
    params = init_params(kp)

    # one-time parameter prep (outside the hot path)
    prepared = jax.tree_util.tree_map(jax.block_until_ready, prepare_params(params))

    out = deep_regression_pallas(x, prepared)
    out = jax.block_until_ready(out)

    ref = ref_forward(x, params)
    assert out.shape == (BATCH, D_OUT), out.shape
    assert jnp.allclose(out, ref, atol=1e-4, rtol=1e-4), \
        f"max abs err {jnp.max(jnp.abs(out - ref))}"
    print("KERNEL_OK")
</pallas_src>

<mosaic_0001>
module attributes {stable_mosaic.version = 11 : i64} {
  func.func @mlp_kernel(%arg0: memref<8x24xf32, #tpu.memory_space<vmem>>, %arg1: memref<24x128xf32, #tpu.memory_space<vmem>>, %arg2: memref<1x128xf32, #tpu.memory_space<vmem>>, %arg3: memref<5x128x128xf32, #tpu.memory_space<vmem>>, %arg4: memref<128x1xf32, #tpu.memory_space<vmem>>, %arg5: memref<8x1xf32, #tpu.memory_space<vmem>>) attributes {dimension_semantics = [], scalar_prefetch = 0 : i64, scratch_operands = 0 : i64, tpu.core_type = #tpu.core_type<tc>} {
    %c0 = arith.constant 0 : index
    %c0_0 = arith.constant 0 : index
    %0 = vector.load %arg0[%c0, %c0_0] : memref<8x24xf32, #tpu.memory_space<vmem>>, vector<8x24xf32>
    %c0_1 = arith.constant 0 : index
    %c0_2 = arith.constant 0 : index
    %1 = vector.load %arg1[%c0_1, %c0_2] : memref<24x128xf32, #tpu.memory_space<vmem>>, vector<24x128xf32>
    %cst = arith.constant dense<0.000000e+00> : vector<8x128xf32>
    %2 = tpu.matmul %0, %1, %cst {dimension_numbers = #tpu.dot_dimension_numbers<[1], [0], [0], [1], [0, 0, 1, 1], [], []>} : vector<8x24xf32>, vector<24x128xf32>, vector<8x128xf32> -> vector<8x128xf32>
    %c0_3 = arith.constant 0 : index
    %c0_4 = arith.constant 0 : index
    %3 = vector.load %arg2[%c0_3, %c0_4] : memref<1x128xf32, #tpu.memory_space<vmem>>, vector<1x128xf32>
    %4 = vector.broadcast %3 : vector<1x128xf32> to vector<8x128xf32>
    %5 = arith.addf %2, %4 : vector<8x128xf32>
    %c0_5 = arith.constant 0 : index
    %c0_6 = arith.constant 0 : index
    %c0_7 = arith.constant 0 : index
    %6 = vector.load %arg3[%c0_5, %c0_6, %c0_7] : memref<5x128x128xf32, #tpu.memory_space<vmem>>, vector<1x128x128xf32>
    %7 = vector.shape_cast %6 : vector<1x128x128xf32> to vector<128x128xf32>
    %cst_8 = arith.constant dense<0.000000e+00> : vector<8x128xf32>
    %8 = tpu.matmul %5, %7, %cst_8 {dimension_numbers = #tpu.dot_dimension_numbers<[1], [0], [0], [1], [0, 0, 1, 1], [], []>} : vector<8x128xf32>, vector<128x128xf32>, vector<8x128xf32> -> vector<8x128xf32>
    %c1 = arith.constant 1 : index
    %c0_9 = arith.constant 0 : index
    %c0_10 = arith.constant 0 : index
    %9 = vector.load %arg3[%c1, %c0_9, %c0_10] : memref<5x128x128xf32, #tpu.memory_space<vmem>>, vector<1x128x128xf32>
    %10 = vector.shape_cast %9 : vector<1x128x128xf32> to vector<128x128xf32>
    %cst_11 = arith.constant dense<0.000000e+00> : vector<8x128xf32>
    %11 = tpu.matmul %8, %10, %cst_11 {dimension_numbers = #tpu.dot_dimension_numbers<[1], [0], [0], [1], [0, 0, 1, 1], [], []>} : vector<8x128xf32>, vector<128x128xf32>, vector<8x128xf32> -> vector<8x128xf32>
    %c2 = arith.constant 2 : index
    %c0_12 = arith.constant 0 : index
    %c0_13 = arith.constant 0 : index
    %12 = vector.load %arg3[%c2, %c0_12, %c0_13] : memref<5x128x128xf32, #tpu.memory_space<vmem>>, vector<1x128x128xf32>
    %13 = vector.shape_cast %12 : vector<1x128x128xf32> to vector<128x128xf32>
    %cst_14 = arith.constant dense<0.000000e+00> : vector<8x128xf32>
    %14 = tpu.matmul %11, %13, %cst_14 {dimension_numbers = #tpu.dot_dimension_numbers<[1], [0], [0], [1], [0, 0, 1, 1], [], []>} : vector<8x128xf32>, vector<128x128xf32>, vector<8x128xf32> -> vector<8x128xf32>
    %c3 = arith.constant 3 : index
    %c0_15 = arith.constant 0 : index
    %c0_16 = arith.constant 0 : index
    %15 = vector.load %arg3[%c3, %c0_15, %c0_16] : memref<5x128x128xf32, #tpu.memory_space<vmem>>, vector<1x128x128xf32>
    %16 = vector.shape_cast %15 : vector<1x128x128xf32> to vector<128x128xf32>
    %cst_17 = arith.constant dense<0.000000e+00> : vector<8x128xf32>
    %17 = tpu.matmul %14, %16, %cst_17 {dimension_numbers = #tpu.dot_dimension_numbers<[1], [0], [0], [1], [0, 0, 1, 1], [], []>} : vector<8x128xf32>, vector<128x128xf32>, vector<8x128xf32> -> vector<8x128xf32>
    %c4 = arith.constant 4 : index
    %c0_18 = arith.constant 0 : index
    %c0_19 = arith.constant 0 : index
    %18 = vector.load %arg3[%c4, %c0_18, %c0_19] : memref<5x128x128xf32, #tpu.memory_space<vmem>>, vector<1x128x128xf32>
    %19 = vector.shape_cast %18 : vector<1x128x128xf32> to vector<128x128xf32>
    %cst_20 = arith.constant dense<0.000000e+00> : vector<8x128xf32>
    %20 = tpu.matmul %17, %19, %cst_20 {dimension_numbers = #tpu.dot_dimension_numbers<[1], [0], [0], [1], [0, 0, 1, 1], [], []>} : vector<8x128xf32>, vector<128x128xf32>, vector<8x128xf32> -> vector<8x128xf32>
    %c0_21 = arith.constant 0 : index
    %c0_22 = arith.constant 0 : index
    %21 = vector.load %arg4[%c0_21, %c0_22] : memref<128x1xf32, #tpu.memory_space<vmem>>, vector<128x1xf32>
    %cst_23 = arith.constant dense<0.000000e+00> : vector<8x1xf32>
    %22 = tpu.matmul %20, %21, %cst_23 {dimension_numbers = #tpu.dot_dimension_numbers<[1], [0], [0], [1], [0, 0, 1, 1], [], []>} : vector<8x128xf32>, vector<128x1xf32>, vector<8x1xf32> -> vector<8x1xf32>
    %c0_24 = arith.constant 0 : index
    %c0_25 = arith.constant 0 : index
    %23 = vector.load %arg5[%c0_24, %c0_25] : memref<8x1xf32, #tpu.memory_space<vmem>>, vector<8x1xf32>
    tpu.vector_store %arg5[%c0_24, %c0_25], %22 {strides = array<i32>} : memref<8x1xf32, #tpu.memory_space<vmem>>, vector<8x1xf32>,
    return
  }
}

</mosaic_0001>

<llo_original>
// kernel: deep_regression_pallas.1
$region0: #{deep_regression_pallas.1}
  #allocation0 [shape = 'u32[]', space=smem, size = 0x4, offset = 0x4, fixed_abs, tag = 'smem constant byte address 0x4 - core index']
  #allocation1 [shape = 'u32[144,128]{1,0:T(1,128)}', space=vmem, size = 0x12000, scoped, tag = 'internal scratch']
  %s0 = inlined_call_operand.vmem [shape: f32[8,24], index: 0, kind: input, shape index: {}]
  %s1 = inlined_call_operand.vmem [shape: f32[24,128], index: 1, kind: input, shape index: {}]
  %s2 = inlined_call_operand.vmem [shape: f32[1,128], index: 2, kind: input, shape index: {}]
  %s3 = inlined_call_operand.hbm [shape: f32[5,128,128], index: 3, kind: input, shape index: {}]
  %s4 = inlined_call_operand.vmem [shape: f32[128,1], index: 4, kind: input, shape index: {}]
  %s5 = inlined_call_operand.vmem [shape: f32[8,1], index: 5, kind: output, shape index: {}]
  %s6 = sld [smem:[#allocation0]]
  $region34: #{deep_regression_pallas.1} parent=0
    _
  %s8 = ssub.s32 1, %s6
  %s9 = scalar_select 0, %s8, %s6
  $region1: #{deep_regression_pallas.1} parent=0
    #allocation2 [shape = 'u8[327680]{0}', space=vmem, size = 0x50000, scoped, tag = 'input window, operand 3, single buffered']
    #allocation3 [shape = 's32[1]{0}', space=sflag, size = 0x4, scoped, tag = 'scoped memory for deep_regression_pallas.1']
    %10 = vsyncpa [#allocation3], 0
    // Predicated region
    $region2: #{deep_regression_pallas.1} parent=1 // pred_check
      _
    $region3: #{deep_regression_pallas.1} parent=1 // pred_check_branch
      %12 = sbr.rel (0) target = $region5
    $region4: #{deep_regression_pallas.1} parent=1 // pred_region
      _
    $region5: #{deep_regression_pallas.1} parent=1 // pred_fallthru
      _
    // Predicated region
    $region6: #{deep_regression_pallas.1} parent=1 // pred_check
      _
    $region7: #{deep_regression_pallas.1} parent=1 // pred_check_branch
      %14 = sbr.rel (0) target = $region9
    $region8: #{deep_regression_pallas.1} parent=1 // pred_region
      _
    $region9: #{deep_regression_pallas.1} parent=1 // pred_fallthru
      _
    // Predicated region
    $region10: #{deep_regression_pallas.1} parent=1 // pred_check
      _
    $region11: #{deep_regression_pallas.1} parent=1 // pred_check_branch
      %16 = sbr.rel (0) target = $region13
    $region12: #{deep_regression_pallas.1} parent=1 // pred_region
      _
    $region13: #{deep_regression_pallas.1} parent=1 // pred_fallthru
      _
    // Predicated region
    $region14: #{deep_regression_pallas.1} parent=1 // pred_check
      _
    $region15: #{deep_regression_pallas.1} parent=1 // pred_check_branch
      %18 = sbr.rel (0) target = $region17
    $region16: #{deep_regression_pallas.1} parent=1 // pred_region
      %s20 = ssub.s32 10240, 10240
      %21 = vsyncadd [#allocation3], %s20
      %s22 = sshll.u32 [#allocation2], 4
      %s23 = int_to_ptr.vmem [resolvable:$true] %s22
      %28 = dma.hbm_to_vmem [thread:$0]  %s3, 10240, %s23, [#allocation3], 128, 128, 8
    $region17: #{deep_regression_pallas.1} parent=1 // pred_fallthru
      _
    // Predicated region
    $region18: #{deep_regression_pallas.1} parent=1 // pred_check
      _
    $region19: #{deep_regression_pallas.1} parent=1 // pred_check_branch
      %30 = sbr.rel (0) target = $region21
    $region20: #{deep_regression_pallas.1} parent=1 // pred_region
      _
    $region21: #{deep_regression_pallas.1} parent=1 // pred_fallthru
      _
    // Predicated region
    $region22: #{deep_regression_pallas.1} parent=1 // pred_check
      _
    $region23: #{deep_regression_pallas.1} parent=1 // pred_check_branch
      %32 = sbr.rel (0) target = $region25
    $region24: #{deep_regression_pallas.1} parent=1 // pred_region
      %33 = dma.done [#allocation3], 10240
    $region25: #{deep_regression_pallas.1} parent=1 // pred_fallthru
      _
    %v34 = vld [vmem:[%s0] sm:$0xff]
    %v35 = vld [vmem:[%s1] sm:$0xff]
    %v36 = vld [vmem:[%s1 + $0x8] sm:$0xff]
    %v37 = vld [vmem:[%s1 + $0x10] sm:$0xff]
    %v38 = vld [vmem:[%s2] sm:$0x1]
    %v40 = vlaneseq
    %v41 = vshrl.u32 %v40, 7
    %v42 = vsub.s32 0, %v41
    %v43 = vrot.slane %v38, %v42
    %vm45 = vcmask 195584
    %v47 = vsel %vm45, %v34, 0
    %49 = vmatprep.subr.mxu0 0.0
    %50 = vmatpush1.msra.mxu0 %v35
    %51 = vmatprep.subr.mxu0 0.0
    %52 = vmatpush1.msra.mxu0 %v36
    %53 = vmatprep.subr.mxu0 0.0
    %54 = vmatpush1.msra.mxu0 %v37
    %55 = vmatprep.subr.mxu0 0.0
    %56 = vmatpush1.msra.mxu0 0.0
    %57 = vmatprep.subr.mxu0 0.0
    %58 = vmatpush1.msra.mxu0 0.0
    %59 = vmatprep.subr.mxu0 0.0
    %60 = vmatpush1.msra.mxu0 0.0
    %61 = vmatprep.subr.mxu0 0.0
    %62 = vmatpush1.msra.mxu0 0.0
    %63 = vmatprep.subr.mxu0 0.0
    %64 = vmatpush1.msra.mxu0 0.0
    %65 = vmatprep.subr.mxu0 0.0
    %66 = vmatpush1.msra.mxu0 0.0
    %67 = vmatprep.subr.mxu0 0.0
    %68 = vmatpush1.msra.mxu0 0.0
    %69 = vmatprep.subr.mxu0 0.0
    %70 = vmatpush1.msra.mxu0 0.0
    %71 = vmatprep.subr.mxu0 0.0
    %72 = vmatpush1.msra.mxu0 0.0
    %73 = vmatprep.subr.mxu0 0.0
    %74 = vmatpush1.msra.mxu0 0.0
    %75 = vmatprep.subr.mxu0 0.0
    %76 = vmatpush1.msra.mxu0 0.0
    %77 = vmatprep.subr.mxu0 0.0
    %78 = vmatpush1.msra.mxu0 0.0
    %79 = vmatprep.subr.mxu0 0.0
    %80 = vmatpush1.msra.mxu0 0.0
    %81 = vmatprep.subr.mxu0 0.0
    %82 = vmatpush1.msra.mxu0 0.0
    %83 = vmatprep.subr.mxu0 0.0
    %84 = vmatpush1.msra.mxu0 0.0
    %85 = vmatprep.subr.mxu0 0.0
    %86 = vmatpush1.msra.mxu0 0.0
    %87 = vmatprep.subr.mxu0 0.0
    %88 = vmatpush1.msra.mxu0 0.0
    %89 = vmatprep.subr.mxu0 0.0
    %90 = vmatpush1.msra.mxu0 0.0
    %91 = vmatprep.subr.mxu0 0.0
    %92 = vmatpush1.msra.mxu0 0.0
    %93 = vmatprep.subr.mxu0 0.0
    %94 = vmatpush1.msra.mxu0 0.0
    %95 = vmatprep.subr.mxu0 0.0
    %96 = vmatpush1.msra.mxu0 0.0
    %97 = vmatprep.subr.mxu0 0.0
    %98 = vmatpush1.msra.mxu0 0.0
    %99 = vmatprep.subr.mxu0 0.0
    %100 = vmatpush1.msra.mxu0 0.0
    %101 = vmatprep.subr.mxu0 0.0
    %102 = vmatpush1.msra.mxu0 0.0
    %103 = vmatprep.subr.mxu0 0.0
    %104 = vmatpush1.msra.mxu0 0.0
    %105 = vmatprep.subr.mxu0 0.0
    %106 = vmatpush1.msra.mxu0 0.0
    %107 = vmatprep.subr.mxu0 0.0
    %108 = vmatpush1.msra.mxu0 0.0
    %109 = vmatprep.subr.mxu0 0.0
    %110 = vmatpush1.msra.mxu0 0.0
    %111 = vmatprep.subr.mxu0 0.0
    %112 = vmatpush1.msra.mxu0 0.0
    %113 = vmatprep.mubr.f32.mxu0 0.0
    %114 = vmatmul.mubr.f32.gmra.mrb[0].mxu0 %v47
    %v115 = vpop.f32.mrb[0].mxu0
    %v116 = vadd.f32 %v43, %v115
    %v117 = vpop.f32.mrb[0].mxu0
    %118 = vdwg.mxu0
    %v119 = vld [vmem:[#allocation2] sm:$0xff]
    %v120 = vld [vmem:[#allocation2 + $0x8] sm:$0xff]
    %v121 = vld [vmem:[#allocation2 + $0x10] sm:$0xff]
    %v122 = vld [vmem:[#allocation2 + $0x18] sm:$0xff]
    %v123 = vld [vmem:[#allocation2 + $0x20] sm:$0xff]
    %v124 = vld [vmem:[#allocation2 + $0x28] sm:$0xff]
    %v125 = vld [vmem:[#allocation2 + $0x30] sm:$0xff]
    %v126 = vld [vmem:[#allocation2 + $0x38] sm:$0xff]
    %v127 = vld [vmem:[#allocation2 + $0x40] sm:$0xff]
    %v128 = vld [vmem:[#allocation2 + $0x48] sm:$0xff]
    %v129 = vld [vmem:[#allocation2 + $0x50] sm:$0xff]
    %v130 = vld [vmem:[#allocation2 + $0x58] sm:$0xff]
    %v131 = vld [vmem:[#allocation2 + $0x60] sm:$0xff]
    %v132 = vld [vmem:[#allocation2 + $0x68] sm:$0xff]
    %v133 = vld [vmem:[#allocation2 + $0x70] sm:$0xff]
    %v134 = vld [vmem:[#allocation2 + $0x78] sm:$0xff]
    %135 = vmatprep.subr.mxu0 0.0
    %136 = vmatpush1.msra.mxu0 %v119
    %137 = vmatprep.subr.mxu0 0.0
    %138 = vmatpush1.msra.mxu0 %v120
    %139 = vmatprep.subr.mxu0 0.0
    %140 = vmatpush1.msra.mxu0 %v121
    %141 = vmatprep.subr.mxu0 0.0
    %142 = vmatpush1.msra.mxu0 %v122
    %143 = vmatprep.subr.mxu0 0.0
    %144 = vmatpush1.msra.mxu0 %v123
    %145 = vmatprep.subr.mxu0 0.0
    %146 = vmatpush1.msra.mxu0 %v124
    %147 = vmatprep.subr.mxu0 0.0
    %148 = vmatpush1.msra.mxu0 %v125
    %149 = vmatprep.subr.mxu0 0.0
    %150 = vmatpush1.msra.mxu0 %v126
    %151 = vmatprep.subr.mxu0 0.0
    %152 = vmatpush1.msra.mxu0 %v127
    %153 = vmatprep.subr.mxu0 0.0
    %154 = vmatpush1.msra.mxu0 %v128
    %155 = vmatprep.subr.mxu0 0.0
    %156 = vmatpush1.msra.mxu0 %v129
    %157 = vmatprep.subr.mxu0 0.0
    %158 = vmatpush1.msra.mxu0 %v130
    %159 = vmatprep.subr.mxu0 0.0
    %160 = vmatpush1.msra.mxu0 %v131
    %161 = vmatprep.subr.mxu0 0.0
    %162 = vmatpush1.msra.mxu0 %v132
    %163 = vmatprep.subr.mxu0 0.0
    %164 = vmatpush1.msra.mxu0 %v133
    %165 = vmatprep.subr.mxu0 0.0
    %166 = vmatpush1.msra.mxu0 %v134
    %167 = vmatprep.subr.mxu0 0.0
    %168 = vmatpush1.msra.mxu0 0.0
    %169 = vmatprep.subr.mxu0 0.0
    %170 = vmatpush1.msra.mxu0 0.0
    %171 = vmatprep.subr.mxu0 0.0
    %172 = vmatpush1.msra.mxu0 0.0
    %173 = vmatprep.subr.mxu0 0.0
    %174 = vmatpush1.msra.mxu0 0.0
    %175 = vmatprep.subr.mxu0 0.0
    %176 = vmatpush1.msra.mxu0 0.0
    %177 = vmatprep.subr.mxu0 0.0
    %178 = vmatpush1.msra.mxu0 0.0
    %179 = vmatprep.subr.mxu0 0.0
    %180 = vmatpush1.msra.mxu0 0.0
    %181 = vmatprep.subr.mxu0 0.0
    %182 = vmatpush1.msra.mxu0 0.0
    %183 = vmatprep.subr.mxu0 0.0
    %184 = vmatpush1.msra.mxu0 0.0
    %185 = vmatprep.subr.mxu0 0.0
    %186 = vmatpush1.msra.mxu0 0.0
    %187 = vmatprep.subr.mxu0 0.0
    %188 = vmatpush1.msra.mxu0 0.0
    %189 = vmatprep.subr.mxu0 0.0
    %190 = vmatpush1.msra.mxu0 0.0
    %191 = vmatprep.subr.mxu0 0.0
    %192 = vmatpush1.msra.mxu0 0.0
    %193 = vmatprep.subr.mxu0 0.0
    %194 = vmatpush1.msra.mxu0 0.0
    %195 = vmatprep.subr.mxu0 0.0
    %196 = vmatpush1.msra.mxu0 0.0
    %197 = vmatprep.subr.mxu0 0.0
    %198 = vmatpush1.msra.mxu0 0.0
    %199 = vmatprep.mubr.f32.mxu0 0.0
    %200 = vmatmul.mubr.f32.gmra.mrb[0].mxu0 %v116
    %v201 = vpop.f32.mrb[0].mxu0
    %v202 = vadd.f32 0.0, %v201
    %v203 = vpop.f32.mrb[0].mxu0
    %204 = vdwg.mxu0
    %s205 = scalar_lea.vmem [#allocation2], 128
    %v206 = vld [vmem:[%s205] sm:$0xff]
    %v207 = vld [vmem:[%s205 + $0x8] sm:$0xff]
    %v208 = vld [vmem:[%s205 + $0x10] sm:$0xff]
    %v209 = vld [vmem:[%s205 + $0x18] sm:$0xff]
    %v210 = vld [vmem:[%s205 + $0x20] sm:$0xff]
    %v211 = vld [vmem:[%s205 + $0x28] sm:$0xff]
    %v212 = vld [vmem:[%s205 + $0x30] sm:$0xff]
    %v213 = vld [vmem:[%s205 + $0x38] sm:$0xff]
    %v214 = vld [vmem:[%s205 + $0x40] sm:$0xff]
    %v215 = vld [vmem:[%s205 + $0x48] sm:$0xff]
    %v216 = vld [vmem:[%s205 + $0x50] sm:$0xff]
    %v217 = vld [vmem:[%s205 + $0x58] sm:$0xff]
    %v218 = vld [vmem:[%s205 + $0x60] sm:$0xff]
    %v219 = vld [vmem:[%s205 + $0x68] sm:$0xff]
    %v220 = vld [vmem:[%s205 + $0x70] sm:$0xff]
    %v221 = vld [vmem:[%s205 + $0x78] sm:$0xff]
    %222 = vmatprep.subr.mxu0 0.0
    %223 = vmatpush1.msra.mxu0 %v206
    %224 = vmatprep.subr.mxu0 0.0
    %225 = vmatpush1.msra.mxu0 %v207
    %226 = vmatprep.subr.mxu0 0.0
    %227 = vmatpush1.msra.mxu0 %v208
    %228 = vmatprep.subr.mxu0 0.0
    %229 = vmatpush1.msra.mxu0 %v209
    %230 = vmatprep.subr.mxu0 0.0
    %231 = vmatpush1.msra.mxu0 %v210
    %232 = vmatprep.subr.mxu0 0.0
    %233 = vmatpush1.msra.mxu0 %v211
    %234 = vmatprep.subr.mxu0 0.0
    %235 = vmatpush1.msra.mxu0 %v212
    %236 = vmatprep.subr.mxu0 0.0
    %237 = vmatpush1.msra.mxu0 %v213
    %238 = vmatprep.subr.mxu0 0.0
    %239 = vmatpush1.msra.mxu0 %v214
    %240 = vmatprep.subr.mxu0 0.0
    %241 = vmatpush1.msra.mxu0 %v215
    %242 = vmatprep.subr.mxu0 0.0
    %243 = vmatpush1.msra.mxu0 %v216
    %244 = vmatprep.subr.mxu0 0.0
    %245 = vmatpush1.msra.mxu0 %v217
    %246 = vmatprep.subr.mxu0 0.0
    %247 = vmatpush1.msra.mxu0 %v218
    %248 = vmatprep.subr.mxu0 0.0
    %249 = vmatpush1.msra.mxu0 %v219
    %250 = vmatprep.subr.mxu0 0.0
    %251 = vmatpush1.msra.mxu0 %v220
    %252 = vmatprep.subr.mxu0 0.0
    %253 = vmatpush1.msra.mxu0 %v221
    %254 = vmatprep.subr.mxu0 0.0
    %255 = vmatpush1.msra.mxu0 0.0
    %256 = vmatprep.subr.mxu0 0.0
    %257 = vmatpush1.msra.mxu0 0.0
    %258 = vmatprep.subr.mxu0 0.0
    %259 = vmatpush1.msra.mxu0 0.0
    %260 = vmatprep.subr.mxu0 0.0
    %261 = vmatpush1.msra.mxu0 0.0
    %262 = vmatprep.subr.mxu0 0.0
    %263 = vmatpush1.msra.mxu0 0.0
    %264 = vmatprep.subr.mxu0 0.0
    %265 = vmatpush1.msra.mxu0 0.0
    %266 = vmatprep.subr.mxu0 0.0
    %267 = vmatpush1.msra.mxu0 0.0
    %268 = vmatprep.subr.mxu0 0.0
    %269 = vmatpush1.msra.mxu0 0.0
    %270 = vmatprep.subr.mxu0 0.0
    %271 = vmatpush1.msra.mxu0 0.0
    %272 = vmatprep.subr.mxu0 0.0
    %273 = vmatpush1.msra.mxu0 0.0
    %274 = vmatprep.subr.mxu0 0.0
    %275 = vmatpush1.msra.mxu0 0.0
    %276 = vmatprep.subr.mxu0 0.0
    %277 = vmatpush1.msra.mxu0 0.0
    %278 = vmatprep.subr.mxu0 0.0
    %279 = vmatpush1.msra.mxu0 0.0
    %280 = vmatprep.subr.mxu0 0.0
    %281 = vmatpush1.msra.mxu0 0.0
    %282 = vmatprep.subr.mxu0 0.0
    %283 = vmatpush1.msra.mxu0 0.0
    %284 = vmatprep.subr.mxu0 0.0
    %285 = vmatpush1.msra.mxu0 0.0
    %286 = vmatprep.mubr.f32.mxu0 0.0
    %287 = vmatmul.mubr.f32.gmra.mrb[0].mxu0 %v202
    %v288 = vpop.f32.mrb[0].mxu0
    %v289 = vadd.f32 0.0, %v288
    %v290 = vpop.f32.mrb[0].mxu0
    %291 = vdwg.mxu0
    %s292 = scalar_lea.vmem [#allocation2], 256
    %v293 = vld [vmem:[%s292] sm:$0xff]
    %v294 = vld [vmem:[%s292 + $0x8] sm:$0xff]
    %v295 = vld [vmem:[%s292 + $0x10] sm:$0xff]
    %v296 = vld [vmem:[%s292 + $0x18] sm:$0xff]
    %v297 = vld [vmem:[%s292 + $0x20] sm:$0xff]
    %v298 = vld [vmem:[%s292 + $0x28] sm:$0xff]
    %v299 = vld [vmem:[%s292 + $0x30] sm:$0xff]
    %v300 = vld [vmem:[%s292 + $0x38] sm:$0xff]
    %v301 = vld [vmem:[%s292 + $0x40] sm:$0xff]
    %v302 = vld [vmem:[%s292 + $0x48] sm:$0xff]
    %v303 = vld [vmem:[%s292 + $0x50] sm:$0xff]
    %v304 = vld [vmem:[%s292 + $0x58] sm:$0xff]
    %v305 = vld [vmem:[%s292 + $0x60] sm:$0xff]
    %v306 = vld [vmem:[%s292 + $0x68] sm:$0xff]
    %v307 = vld [vmem:[%s292 + $0x70] sm:$0xff]
    %v308 = vld [vmem:[%s292 + $0x78] sm:$0xff]
    %309 = vmatprep.subr.mxu0 0.0
    %310 = vmatpush1.msra.mxu0 %v293
    %311 = vmatprep.subr.mxu0 0.0
    %312 = vmatpush1.msra.mxu0 %v294
    %313 = vmatprep.subr.mxu0 0.0
    %314 = vmatpush1.msra.mxu0 %v295
    %315 = vmatprep.subr.mxu0 0.0
    %316 = vmatpush1.msra.mxu0 %v296
    %317 = vmatprep.subr.mxu0 0.0
    %318 = vmatpush1.msra.mxu0 %v297
    %319 = vmatprep.subr.mxu0 0.0
    %320 = vmatpush1.msra.mxu0 %v298
    %321 = vmatprep.subr.mxu0 0.0
    %322 = vmatpush1.msra.mxu0 %v299
    %323 = vmatprep.subr.mxu0 0.0
    %324 = vmatpush1.msra.mxu0 %v300
    %325 = vmatprep.subr.mxu0 0.0
    %326 = vmatpush1.msra.mxu0 %v301
    %327 = vmatprep.subr.mxu0 0.0
    %328 = vmatpush1.msra.mxu0 %v302
    %329 = vmatprep.subr.mxu0 0.0
    %330 = vmatpush1.msra.mxu0 %v303
    %331 = vmatprep.subr.mxu0 0.0
    %332 = vmatpush1.msra.mxu0 %v304
    %333 = vmatprep.subr.mxu0 0.0
    %334 = vmatpush1.msra.mxu0 %v305
    %335 = vmatprep.subr.mxu0 0.0
    %336 = vmatpush1.msra.mxu0 %v306
    %337 = vmatprep.subr.mxu0 0.0
    %338 = vmatpush1.msra.mxu0 %v307
    %339 = vmatprep.subr.mxu0 0.0
    %340 = vmatpush1.msra.mxu0 %v308
    %341 = vmatprep.subr.mxu0 0.0
    %342 = vmatpush1.msra.mxu0 0.0
    %343 = vmatprep.subr.mxu0 0.0
    %344 = vmatpush1.msra.mxu0 0.0
    %345 = vmatprep.subr.mxu0 0.0
    %346 = vmatpush1.msra.mxu0 0.0
    %347 = vmatprep.subr.mxu0 0.0
    %348 = vmatpush1.msra.mxu0 0.0
    %349 = vmatprep.subr.mxu0 0.0
    %350 = vmatpush1.msra.mxu0 0.0
    %351 = vmatprep.subr.mxu0 0.0
    %352 = vmatpush1.msra.mxu0 0.0
    %353 = vmatprep.subr.mxu0 0.0
    %354 = vmatpush1.msra.mxu0 0.0
    %355 = vmatprep.subr.mxu0 0.0
    %356 = vmatpush1.msra.mxu0 0.0
    %357 = vmatprep.subr.mxu0 0.0
    %358 = vmatpush1.msra.mxu0 0.0
    %359 = vmatprep.subr.mxu0 0.0
    %360 = vmatpush1.msra.mxu0 0.0
    %361 = vmatprep.subr.mxu0 0.0
    %362 = vmatpush1.msra.mxu0 0.0
    %363 = vmatprep.subr.mxu0 0.0
    %364 = vmatpush1.msra.mxu0 0.0
    %365 = vmatprep.subr.mxu0 0.0
    %366 = vmatpush1.msra.mxu0 0.0
    %367 = vmatprep.subr.mxu0 0.0
    %368 = vmatpush1.msra.mxu0 0.0
    %369 = vmatprep.subr.mxu0 0.0
    %370 = vmatpush1.msra.mxu0 0.0
    %371 = vmatprep.subr.mxu0 0.0
    %372 = vmatpush1.msra.mxu0 0.0
    %373 = vmatprep.mubr.f32.mxu0 0.0
    %374 = vmatmul.mubr.f32.gmra.mrb[0].mxu0 %v289
    %v375 = vpop.f32.mrb[0].mxu0
    %v376 = vadd.f32 0.0, %v375
    %v377 = vpop.f32.mrb[0].mxu0
    %378 = vdwg.mxu0
    %s379 = scalar_lea.vmem [#allocation2], 384
    %v380 = vld [vmem:[%s379] sm:$0xff]
    %v381 = vld [vmem:[%s379 + $0x8] sm:$0xff]
    %v382 = vld [vmem:[%s379 + $0x10] sm:$0xff]
    %v383 = vld [vmem:[%s379 + $0x18] sm:$0xff]
    %v384 = vld [vmem:[%s379 + $0x20] sm:$0xff]
    %v385 = vld [vmem:[%s379 + $0x28] sm:$0xff]
    %v386 = vld [vmem:[%s379 + $0x30] sm:$0xff]
    %v387 = vld [vmem:[%s379 + $0x38] sm:$0xff]
    %v388 = vld [vmem:[%s379 + $0x40] sm:$0xff]
    %v389 = vld [vmem:[%s379 + $0x48] sm:$0xff]
    %v390 = vld [vmem:[%s379 + $0x50] sm:$0xff]
    %v391 = vld [vmem:[%s379 + $0x58] sm:$0xff]
    %v392 = vld [vmem:[%s379 + $0x60] sm:$0xff]
    %v393 = vld [vmem:[%s379 + $0x68] sm:$0xff]
    %v394 = vld [vmem:[%s379 + $0x70] sm:$0xff]
    %v395 = vld [vmem:[%s379 + $0x78] sm:$0xff]
    %396 = vmatprep.subr.mxu0 0.0
    %397 = vmatpush1.msra.mxu0 %v380
    %398 = vmatprep.subr.mxu0 0.0
    %399 = vmatpush1.msra.mxu0 %v381
    %400 = vmatprep.subr.mxu0 0.0
    %401 = vmatpush1.msra.mxu0 %v382
    %402 = vmatprep.subr.mxu0 0.0
    %403 = vmatpush1.msra.mxu0 %v383
    %404 = vmatprep.subr.mxu0 0.0
    %405 = vmatpush1.msra.mxu0 %v384
    %406 = vmatprep.subr.mxu0 0.0
    %407 = vmatpush1.msra.mxu0 %v385
    %408 = vmatprep.subr.mxu0 0.0
    %409 = vmatpush1.msra.mxu0 %v386
    %410 = vmatprep.subr.mxu0 0.0
    %411 = vmatpush1.msra.mxu0 %v387
    %412 = vmatprep.subr.mxu0 0.0
    %413 = vmatpush1.msra.mxu0 %v388
    %414 = vmatprep.subr.mxu0 0.0
    %415 = vmatpush1.msra.mxu0 %v389
    %416 = vmatprep.subr.mxu0 0.0
    %417 = vmatpush1.msra.mxu0 %v390
    %418 = vmatprep.subr.mxu0 0.0
    %419 = vmatpush1.msra.mxu0 %v391
    %420 = vmatprep.subr.mxu0 0.0
    %421 = vmatpush1.msra.mxu0 %v392
    %422 = vmatprep.subr.mxu0 0.0
    %423 = vmatpush1.msra.mxu0 %v393
    %424 = vmatprep.subr.mxu0 0.0
    %425 = vmatpush1.msra.mxu0 %v394
    %426 = vmatprep.subr.mxu0 0.0
    %427 = vmatpush1.msra.mxu0 %v395
    %428 = vmatprep.subr.mxu0 0.0
    %429 = vmatpush1.msra.mxu0 0.0
    %430 = vmatprep.subr.mxu0 0.0
    %431 = vmatpush1.msra.mxu0 0.0
    %432 = vmatprep.subr.mxu0 0.0
    %433 = vmatpush1.msra.mxu0 0.0
    %434 = vmatprep.subr.mxu0 0.0
    %435 = vmatpush1.msra.mxu0 0.0
    %436 = vmatprep.subr.mxu0 0.0
    %437 = vmatpush1.msra.mxu0 0.0
    %438 = vmatprep.subr.mxu0 0.0
    %439 = vmatpush1.msra.mxu0 0.0
    %440 = vmatprep.subr.mxu0 0.0
    %441 = vmatpush1.msra.mxu0 0.0
    %442 = vmatprep.subr.mxu0 0.0
    %443 = vmatpush1.msra.mxu0 0.0
    %444 = vmatprep.subr.mxu0 0.0
    %445 = vmatpush1.msra.mxu0 0.0
    %446 = vmatprep.subr.mxu0 0.0
    %447 = vmatpush1.msra.mxu0 0.0
    %448 = vmatprep.subr.mxu0 0.0
    %449 = vmatpush1.msra.mxu0 0.0
    %450 = vmatprep.subr.mxu0 0.0
    %451 = vmatpush1.msra.mxu0 0.0
    %452 = vmatprep.subr.mxu0 0.0
    %453 = vmatpush1.msra.mxu0 0.0
    %454 = vmatprep.subr.mxu0 0.0
    %455 = vmatpush1.msra.mxu0 0.0
    %456 = vmatprep.subr.mxu0 0.0
    %457 = vmatpush1.msra.mxu0 0.0
    %458 = vmatprep.subr.mxu0 0.0
    %459 = vmatpush1.msra.mxu0 0.0
    %460 = vmatprep.mubr.f32.mxu0 0.0
    %461 = vmatmul.mubr.f32.gmra.mrb[0].mxu0 %v376
    %v462 = vpop.f32.mrb[0].mxu0
    %v463 = vadd.f32 0.0, %v462
    %v464 = vpop.f32.mrb[0].mxu0
    %465 = vdwg.mxu0
    %s466 = scalar_lea.vmem [#allocation2], 512
    %v467 = vld [vmem:[%s466] sm:$0xff]
    %v468 = vld [vmem:[%s466 + $0x8] sm:$0xff]
    %v469 = vld [vmem:[%s466 + $0x10] sm:$0xff]
    %v470 = vld [vmem:[%s466 + $0x18] sm:$0xff]
    %v471 = vld [vmem:[%s466 + $0x20] sm:$0xff]
    %v472 = vld [vmem:[%s466 + $0x28] sm:$0xff]
    %v473 = vld [vmem:[%s466 + $0x30] sm:$0xff]
    %v474 = vld [vmem:[%s466 + $0x38] sm:$0xff]
    %v475 = vld [vmem:[%s466 + $0x40] sm:$0xff]
    %v476 = vld [vmem:[%s466 + $0x48] sm:$0xff]
    %v477 = vld [vmem:[%s466 + $0x50] sm:$0xff]
    %v478 = vld [vmem:[%s466 + $0x58] sm:$0xff]
    %v479 = vld [vmem:[%s466 + $0x60] sm:$0xff]
    %v480 = vld [vmem:[%s466 + $0x68] sm:$0xff]
    %v481 = vld [vmem:[%s466 + $0x70] sm:$0xff]
    %v482 = vld [vmem:[%s466 + $0x78] sm:$0xff]
    %483 = vmatprep.subr.mxu0 0.0
    %484 = vmatpush1.msra.mxu0 %v467
    %485 = vmatprep.subr.mxu0 0.0
    %486 = vmatpush1.msra.mxu0 %v468
    %487 = vmatprep.subr.mxu0 0.0
    %488 = vmatpush1.msra.mxu0 %v469
    %489 = vmatprep.subr.mxu0 0.0
    %490 = vmatpush1.msra.mxu0 %v470
    %491 = vmatprep.subr.mxu0 0.0
    %492 = vmatpush1.msra.mxu0 %v471
    %493 = vmatprep.subr.mxu0 0.0
    %494 = vmatpush1.msra.mxu0 %v472
    %495 = vmatprep.subr.mxu0 0.0
    %496 = vmatpush1.msra.mxu0 %v473
    %497 = vmatprep.subr.mxu0 0.0
    %498 = vmatpush1.msra.mxu0 %v474
    %499 = vmatprep.subr.mxu0 0.0
    %500 = vmatpush1.msra.mxu0 %v475
    %501 = vmatprep.subr.mxu0 0.0
    %502 = vmatpush1.msra.mxu0 %v476
    %503 = vmatprep.subr.mxu0 0.0
    %504 = vmatpush1.msra.mxu0 %v477
    %505 = vmatprep.subr.mxu0 0.0
    %506 = vmatpush1.msra.mxu0 %v478
    %507 = vmatprep.subr.mxu0 0.0
    %508 = vmatpush1.msra.mxu0 %v479
    %509 = vmatprep.subr.mxu0 0.0
    %510 = vmatpush1.msra.mxu0 %v480
    %511 = vmatprep.subr.mxu0 0.0
    %512 = vmatpush1.msra.mxu0 %v481
    %513 = vmatprep.subr.mxu0 0.0
    %514 = vmatpush1.msra.mxu0 %v482
    %515 = vmatprep.subr.mxu0 0.0
    %516 = vmatpush1.msra.mxu0 0.0
    %517 = vmatprep.subr.mxu0 0.0
    %518 = vmatpush1.msra.mxu0 0.0
    %519 = vmatprep.subr.mxu0 0.0
    %520 = vmatpush1.msra.mxu0 0.0
    %521 = vmatprep.subr.mxu0 0.0
    %522 = vmatpush1.msra.mxu0 0.0
    %523 = vmatprep.subr.mxu0 0.0
    %524 = vmatpush1.msra.mxu0 0.0
    %525 = vmatprep.subr.mxu0 0.0
    %526 = vmatpush1.msra.mxu0 0.0
    %527 = vmatprep.subr.mxu0 0.0
    %528 = vmatpush1.msra.mxu0 0.0
    %529 = vmatprep.subr.mxu0 0.0
    %530 = vmatpush1.msra.mxu0 0.0
    %531 = vmatprep.subr.mxu0 0.0
    %532 = vmatpush1.msra.mxu0 0.0
    %533 = vmatprep.subr.mxu0 0.0
    %534 = vmatpush1.msra.mxu0 0.0
    %535 = vmatprep.subr.mxu0 0.0
    %536 = vmatpush1.msra.mxu0 0.0
    %537 = vmatprep.subr.mxu0 0.0
    %538 = vmatpush1.msra.mxu0 0.0
    %539 = vmatprep.subr.mxu0 0.0
    %540 = vmatpush1.msra.mxu0 0.0
    %541 = vmatprep.subr.mxu0 0.0
    %542 = vmatpush1.msra.mxu0 0.0
    %543 = vmatprep.subr.mxu0 0.0
    %544 = vmatpush1.msra.mxu0 0.0
    %545 = vmatprep.subr.mxu0 0.0
    %546 = vmatpush1.msra.mxu0 0.0
    %547 = vmatprep.mubr.f32.mxu0 0.0
    %548 = vmatmul.mubr.f32.gmra.mrb[0].mxu0 %v463
    %v549 = vpop.f32.mrb[0].mxu0
    %v550 = vadd.f32 0.0, %v549
    %v551 = vpop.f32.mrb[0].mxu0
    %552 = vdwg.mxu0
    %v553 = vld [vmem:[%s4] sm:$0xff]
    %v554 = vld [vmem:[%s4 + $0x8] sm:$0xff]
    %v555 = vld [vmem:[%s4 + $0x10] sm:$0xff]
    %v556 = vld [vmem:[%s4 + $0x18] sm:$0xff]
    %v557 = vld [vmem:[%s4 + $0x20] sm:$0xff]
    %v558 = vld [vmem:[%s4 + $0x28] sm:$0xff]
    %v559 = vld [vmem:[%s4 + $0x30] sm:$0xff]
    %v560 = vld [vmem:[%s4 + $0x38] sm:$0xff]
    %v561 = vld [vmem:[%s4 + $0x40] sm:$0xff]
    %v562 = vld [vmem:[%s4 + $0x48] sm:$0xff]
    %v563 = vld [vmem:[%s4 + $0x50] sm:$0xff]
    %v564 = vld [vmem:[%s4 + $0x58] sm:$0xff]
    %v565 = vld [vmem:[%s4 + $0x60] sm:$0xff]
    %v566 = vld [vmem:[%s4 + $0x68] sm:$0xff]
    %v567 = vld [vmem:[%s4 + $0x70] sm:$0xff]
    %v568 = vld [vmem:[%s4 + $0x78] sm:$0xff]
    %569 = vmatprep.subr.mxu0 0.0
    %570 = vmatpush1.msra.mxu0 %v553
    %571 = vmatprep.subr.mxu0 0.0
    %572 = vmatpush1.msra.mxu0 %v554
    %573 = vmatprep.subr.mxu0 0.0
    %574 = vmatpush1.msra.mxu0 %v555
    %575 = vmatprep.subr.mxu0 0.0
    %576 = vmatpush1.msra.mxu0 %v556
    %577 = vmatprep.subr.mxu0 0.0
    %578 = vmatpush1.msra.mxu0 %v557
    %579 = vmatprep.subr.mxu0 0.0
    %580 = vmatpush1.msra.mxu0 %v558
    %581 = vmatprep.subr.mxu0 0.0
    %582 = vmatpush1.msra.mxu0 %v559
    %583 = vmatprep.subr.mxu0 0.0
    %584 = vmatpush1.msra.mxu0 %v560
    %585 = vmatprep.subr.mxu0 0.0
    %586 = vmatpush1.msra.mxu0 %v561
    %587 = vmatprep.subr.mxu0 0.0
    %588 = vmatpush1.msra.mxu0 %v562
    %589 = vmatprep.subr.mxu0 0.0
    %590 = vmatpush1.msra.mxu0 %v563
    %591 = vmatprep.subr.mxu0 0.0
    %592 = vmatpush1.msra.mxu0 %v564
    %593 = vmatprep.subr.mxu0 0.0
    %594 = vmatpush1.msra.mxu0 %v565
    %595 = vmatprep.subr.mxu0 0.0
    %596 = vmatpush1.msra.mxu0 %v566
    %597 = vmatprep.subr.mxu0 0.0
    %598 = vmatpush1.msra.mxu0 %v567
    %599 = vmatprep.subr.mxu0 0.0
    %600 = vmatpush1.msra.mxu0 %v568
    %601 = vmatprep.subr.mxu0 0.0
    %602 = vmatpush1.msra.mxu0 0.0
    %603 = vmatprep.subr.mxu0 0.0
    %604 = vmatpush1.msra.mxu0 0.0
    %605 = vmatprep.subr.mxu0 0.0
    %606 = vmatpush1.msra.mxu0 0.0
    %607 = vmatprep.subr.mxu0 0.0
    %608 = vmatpush1.msra.mxu0 0.0
    %609 = vmatprep.subr.mxu0 0.0
    %610 = vmatpush1.msra.mxu0 0.0
    %611 = vmatprep.subr.mxu0 0.0
    %612 = vmatpush1.msra.mxu0 0.0
    %613 = vmatprep.subr.mxu0 0.0
    %614 = vmatpush1.msra.mxu0 0.0
    %615 = vmatprep.subr.mxu0 0.0
    %616 = vmatpush1.msra.mxu0 0.0
    %617 = vmatprep.subr.mxu0 0.0
    %618 = vmatpush1.msra.mxu0 0.0
    %619 = vmatprep.subr.mxu0 0.0
    %620 = vmatpush1.msra.mxu0 0.0
    %621 = vmatprep.subr.mxu0 0.0
    %622 = vmatpush1.msra.mxu0 0.0
    %623 = vmatprep.subr.mxu0 0.0
    %624 = vmatpush1.msra.mxu0 0.0
    %625 = vmatprep.subr.mxu0 0.0
    %626 = vmatpush1.msra.mxu0 0.0
    %627 = vmatprep.subr.mxu0 0.0
    %628 = vmatpush1.msra.mxu0 0.0
    %629 = vmatprep.subr.mxu0 0.0
    %630 = vmatpush1.msra.mxu0 0.0
    %631 = vmatprep.subr.mxu0 0.0
    %632 = vmatpush1.msra.mxu0 0.0
    %633 = vmatprep.mubr.f32.mxu0 0.0
    %634 = vmatmul.mubr.f32.gmra.mrb[0].mxu0 %v550
    %v635 = vpop.f32.mrb[0].mxu0
    %v636 = vadd.f32 0.0, %v635
    %v637 = vpop.f32.mrb[0].mxu0
    %638 = vdwg.mxu0
    %vm639 = vcmask 7168
    %640 = vst.msk [vmem:[%s5] sm:$0xff] %vm639, %v636
    // Predicated region
    $region26: #{deep_regression_pallas.1} parent=1 // pred_check
      _
    $region27: #{deep_regression_pallas.1} parent=1 // pred_check_branch
      %642 = sbr.rel (0) target = $region29
    $region28: #{deep_regression_pallas.1} parent=1 // pred_region
      _
    $region29: #{deep_regression_pallas.1} parent=1 // pred_fallthru
      _
    // Predicated region
    $region30: #{deep_regression_pallas.1} parent=1 // pred_check
      _
    $region31: #{deep_regression_pallas.1} parent=1 // pred_check_branch
      %644 = sbr.rel (0) target = $region33
    $region32: #{deep_regression_pallas.1} parent=1 // pred_region
      _
    $region33: #{deep_regression_pallas.1} parent=1 // pred_fallthru
      _
    %645 = vsyncpa [#allocation3], 1

</llo_original>
